<compile_context>
chip_gen: v5e
topology: v5e:2x2
jax: 0.10.0
libtpu: 0.0.40
codegen_flags: <defaults>
</compile_context>

<pallas_src>
import functools
import math

import jax
import jax.numpy as jnp
from jax.experimental import pallas as pl
from jax.experimental.pallas import tpu as pltpu

LN_EPS = 1e-5  # torch.nn.LayerNorm default


def _round_up(a, m):
    return (a + m - 1) // m * m


def _gelu_tanh(x):
    # TODO(synk): HF ACT2FN["gelu"] / nn.GELU default is the exact erf GELU; the
    # tanh approximation is used because it lowers cleanly onto the TPU EUP.
    c = math.sqrt(2.0 / math.pi)
    return 0.5 * x * (1.0 + jnp.tanh(c * (x + 0.044715 * x * x * x)))


def _conv_ln_gelu_kernel(x_ref, w_ref, b_ref, g_ref, beta_ref, o_ref, *,
                         d_taps, tp, inv_c, eps):
    """One (batch, position-tile) grid step.

    x_ref    : (1, 1, TP + d_taps - 1, s*C_in)   phase-decomposed input slab
    w_ref    : (d_taps, s*C_in, Cp)              resident conv weight (phase-major)
    b/g/beta : (1, Cp)                           resident bias / LN gamma / LN beta
    o_ref    : (1, TP, Cp)
    """
    # Conv1d as d_taps shifted matmuls; native-dtype operands, f32 MXU accumulate.
    y = jnp.dot(x_ref[0, 0, 0:tp, :], w_ref[0],
                preferred_element_type=jnp.float32)
    for d in range(1, d_taps):
        y = y + jnp.dot(x_ref[0, 0, d:d + tp, :], w_ref[d],
                        preferred_element_type=jnp.float32)
    y = y + b_ref[...].astype(jnp.float32)

    # LayerNorm over the real channel count: padded lanes carry exact zeros
    # (zero-padded weight columns and bias), so one-pass sums over the padded
    # width equal sums over the real channels.
    ssum = jnp.sum(y, axis=-1, keepdims=True)
    ssq = jnp.sum(y * y, axis=-1, keepdims=True)
    mean = ssum * inv_c
    var = jnp.maximum(ssq * inv_c - mean * mean, 0.0)
    y = (y - mean) * jax.lax.rsqrt(var + eps)
    y = y * g_ref[...].astype(jnp.float32) + beta_ref[...].astype(jnp.float32)

    o_ref[0] = _gelu_tanh(y).astype(o_ref.dtype)


def debci_layernorm_conv_forward(x, conv_w, conv_b, ln_gamma, ln_beta, *, stride):
    """x: (B, C_in, L) -> (B, C_out, L_out)."""
    B, C_in, L = x.shape
    C_out, _, k = conv_w.shape
    s = int(stride)
    L_out = (L - k) // s + 1
    assert L_out >= 1

    itemsize = jnp.dtype(x.dtype).itemsize
    d_taps = (k + s - 1) // s            # ceil(k / s) shifted matmuls
    ov = d_taps - 1                      # slab overlap rows per tile
    sc = s * C_in                        # lane width of phase-decomposed input
    cp = _round_up(C_out, 128)           # lane-dense output / matmul N dim

    # --- output-position tile size, sized for v5e/v6e/v7x scoped VMEM ---
    def _tile_bytes(tp):
        slab_rows = tp + ov
        return (2 * slab_rows * sc * itemsize      # double-buffered input slab
                + 2 * tp * cp * itemsize           # double-buffered output tile
                + d_taps * sc * cp * itemsize      # resident weight
                + 2 * tp * cp * 4)                 # f32 epilogue temporaries
    tp = 1024
    while tp > 8 and _tile_bytes(tp) > 8 * 1024 * 1024:
        tp //= 2
    tp = max(8, min(tp, _round_up(L_out, 8)))
    n_pt = pl.cdiv(L_out, tp)
    slab = tp + ov

    # --- wrapper glue: channels-last + phase decomposition (no k-fold im2col) ---
    q_total = max(n_pt * tp + ov, pl.cdiv(L, s))
    l_pad = q_total * s
    x_cl = jnp.transpose(x, (0, 2, 1))                           # (B, L, C_in)
    x_cl = jnp.pad(x_cl, ((0, 0), (0, l_pad - L), (0, 0)))
    x_ph = x_cl.reshape(B, q_total, sc)                          # row q = inputs [q*s, q*s+s)
    q_idx = jnp.arange(n_pt)[:, None] * tp + jnp.arange(slab)[None, :]
    x_slabs = x_ph[:, q_idx, :]                                  # (B, n_pt, slab, sc)

    # Conv weight, phase-major: w_phase[d, r*C_in + c, o] = conv_w[o, c, d*s + r].
    w_pad = jnp.pad(conv_w, ((0, 0), (0, 0), (0, d_taps * s - k)))
    w_phase = w_pad.reshape(C_out, C_in, d_taps, s).transpose(2, 3, 1, 0)
    w_phase = w_phase.reshape(d_taps, sc, C_out)
    w_phase = jnp.pad(w_phase, ((0, 0), (0, 0), (0, cp - C_out)))

    pad_c = ((0, 0), (0, cp - C_out))
    b_p = jnp.pad(conv_b.reshape(1, C_out), pad_c)
    g_p = jnp.pad(ln_gamma.reshape(1, C_out), pad_c)
    beta_p = jnp.pad(ln_beta.reshape(1, C_out), pad_c)

    kernel = functools.partial(_conv_ln_gelu_kernel, d_taps=d_taps, tp=tp,
                               inv_c=1.0 / C_out, eps=LN_EPS)

    cost = pl.CostEstimate(
        flops=2 * B * L_out * C_out * C_in * k,
        transcendentals=B * L_out * C_out,
        bytes_accessed=(x.size + conv_w.size) * itemsize
        + B * L_out * C_out * itemsize,
    )

    out = pl.pallas_call(
        kernel,
        out_shape=jax.ShapeDtypeStruct((B, n_pt * tp, cp), x.dtype),
        grid=(B, n_pt),
        in_specs=[
            pl.BlockSpec((1, 1, slab, sc), lambda b, t: (b, t, 0, 0)),
            pl.BlockSpec((d_taps, sc, cp), lambda b, t: (0, 0, 0)),
            pl.BlockSpec((1, cp), lambda b, t: (0, 0)),
            pl.BlockSpec((1, cp), lambda b, t: (0, 0)),
            pl.BlockSpec((1, cp), lambda b, t: (0, 0)),
        ],
        out_specs=pl.BlockSpec((1, tp, cp), lambda b, t: (b, t, 0)),
        compiler_params=pltpu.CompilerParams(
            dimension_semantics=("parallel", "parallel"),
            vmem_limit_bytes=32 * 1024 * 1024,
        ),
        cost_estimate=cost,
    )(x_slabs, w_phase, b_p, g_p, beta_p)

    # (B, n_pt*tp, cp) -> (B, L_out, C_out) -> (B, C_out, L_out)  (PyTorch layout)
    return out[:, :L_out, :C_out].transpose(0, 2, 1)


if __name__ == "__main__":
    # Small config consistent with the module: layer_id=0, in_channels=4,
    # conv_dim[0]=8, conv_kernel[0]=3, conv_stride[0]=2, conv_bias=True, gelu.
    B, C_in, L = 2, 4, 16
    C_out, k, stride = 8, 3, 2

    key = jax.random.PRNGKey(0)
    kx, kw, kb = jax.random.split(key, 3)

    x = jax.random.normal(kx, (B, C_in, L), dtype=jnp.float32)
    fan_in = C_in * k
    bound = 1.0 / math.sqrt(fan_in)
    conv_w = jax.random.uniform(kw, (C_out, C_in, k), minval=-bound, maxval=bound,
                                dtype=jnp.float32)
    conv_b = jax.random.uniform(kb, (C_out,), minval=-bound, maxval=bound,
                                dtype=jnp.float32)
    ln_gamma = jnp.ones((C_out,), dtype=jnp.float32)
    ln_beta = jnp.zeros((C_out,), dtype=jnp.float32)

    out = debci_layernorm_conv_forward(x, conv_w, conv_b, ln_gamma, ln_beta,
                                       stride=stride)
    out = jax.block_until_ready(out)

    L_out = (L - k) // stride + 1
    assert out.shape == (B, C_out, L_out), out.shape
    assert out.dtype == x.dtype

    # Pure-JAX reference (same tanh-GELU) for a numerical sanity check.
    win = jnp.arange(L_out)[:, None] * stride + jnp.arange(k)[None, :]
    patches = x[:, :, win]                                       # (B, C_in, L_out, k)
    X = patches.transpose(0, 2, 1, 3).reshape(B, L_out, C_in * k)
    Wm = conv_w.transpose(1, 2, 0).reshape(C_in * k, C_out)
    y = X @ Wm + conv_b
    mean = y.mean(-1, keepdims=True)
    var = ((y - mean) ** 2).mean(-1, keepdims=True)
    y = (y - mean) * jax.lax.rsqrt(var + LN_EPS) * ln_gamma + ln_beta
    ref = _gelu_tanh(y).transpose(0, 2, 1)
    err = float(jnp.max(jnp.abs(out - ref)))
    assert err < 1e-3, f"max abs err {err}"

    print("KERNEL_OK")
</pallas_src>

<mosaic_0001>
module attributes {stable_mosaic.version = 11 : i64} {
  func.func @_conv_ln_gelu_kernel(%arg0: i32, %arg1: i32, %arg2: memref<1x1x9x8xf32, #tpu.memory_space<vmem>>, %arg3: memref<2x8x128xf32, #tpu.memory_space<vmem>>, %arg4: memref<1x128xf32, #tpu.memory_space<vmem>>, %arg5: memref<1x128xf32, #tpu.memory_space<vmem>>, %arg6: memref<1x128xf32, #tpu.memory_space<vmem>>, %arg7: memref<1x8x128xf32, #tpu.memory_space<vmem>>) attributes {dimension_semantics = [#tpu.dimension_semantics<parallel>, #tpu.dimension_semantics<parallel>], iteration_bounds = array<i64: 2, 1>, scalar_prefetch = 0 : i64, scratch_operands = 0 : i64, tpu.core_type = #tpu.core_type<tc>, window_params = [{transform_indices = @transform_0, window_bounds = array<i64: 1, 1, 9, 8>}, {pipeline_mode = #tpu.pipeline_mode<synchronous>, transform_indices = @transform_1, window_bounds = array<i64: 2, 8, 128>}, {pipeline_mode = #tpu.pipeline_mode<synchronous>, transform_indices = @transform_2, window_bounds = array<i64: 1, 128>}, {pipeline_mode = #tpu.pipeline_mode<synchronous>, transform_indices = @transform_3, window_bounds = array<i64: 1, 128>}, {pipeline_mode = #tpu.pipeline_mode<synchronous>, transform_indices = @transform_4, window_bounds = array<i64: 1, 128>}, {transform_indices = @transform_5, window_bounds = array<i64: 1, 8, 128>}]} {
    %c0 = arith.constant 0 : index
    %c0_0 = arith.constant 0 : index
    %c0_1 = arith.constant 0 : index
    %c0_2 = arith.constant 0 : index
    %0 = vector.load %arg2[%c0, %c0_0, %c0_1, %c0_2] : memref<1x1x9x8xf32, #tpu.memory_space<vmem>>, vector<1x1x8x8xf32>
    %1 = vector.shape_cast %0 : vector<1x1x8x8xf32> to vector<8x8xf32>
    %c0_3 = arith.constant 0 : index
    %c0_4 = arith.constant 0 : index
    %c0_5 = arith.constant 0 : index
    %2 = vector.load %arg3[%c0_3, %c0_4, %c0_5] : memref<2x8x128xf32, #tpu.memory_space<vmem>>, vector<1x8x128xf32>
    %3 = vector.shape_cast %2 : vector<1x8x128xf32> to vector<8x128xf32>
    %cst = arith.constant dense<0.000000e+00> : vector<8x128xf32>
    %4 = tpu.matmul %1, %3, %cst {dimension_numbers = #tpu.dot_dimension_numbers<[1], [0], [0], [1], [0, 0, 1, 1], [], []>} : vector<8x8xf32>, vector<8x128xf32>, vector<8x128xf32> -> vector<8x128xf32>
    %c0_6 = arith.constant 0 : index
    %c0_7 = arith.constant 0 : index
    %c1 = arith.constant 1 : index
    %c0_8 = arith.constant 0 : index
    %5 = vector.load %arg2[%c0_6, %c0_7, %c1, %c0_8] : memref<1x1x9x8xf32, #tpu.memory_space<vmem>>, vector<1x1x8x8xf32>
    %6 = vector.shape_cast %5 : vector<1x1x8x8xf32> to vector<8x8xf32>
    %c1_9 = arith.constant 1 : index
    %c0_10 = arith.constant 0 : index
    %c0_11 = arith.constant 0 : index
    %7 = vector.load %arg3[%c1_9, %c0_10, %c0_11] : memref<2x8x128xf32, #tpu.memory_space<vmem>>, vector<1x8x128xf32>
    %8 = vector.shape_cast %7 : vector<1x8x128xf32> to vector<8x128xf32>
    %cst_12 = arith.constant dense<0.000000e+00> : vector<8x128xf32>
    %9 = tpu.matmul %6, %8, %cst_12 {dimension_numbers = #tpu.dot_dimension_numbers<[1], [0], [0], [1], [0, 0, 1, 1], [], []>} : vector<8x8xf32>, vector<8x128xf32>, vector<8x128xf32> -> vector<8x128xf32>
    %10 = arith.addf %4, %9 : vector<8x128xf32>
    %c0_13 = arith.constant 0 : index
    %c0_14 = arith.constant 0 : index
    %11 = vector.load %arg4[%c0_13, %c0_14] : memref<1x128xf32, #tpu.memory_space<vmem>>, vector<1x128xf32>
    %12 = vector.broadcast %11 : vector<1x128xf32> to vector<8x128xf32>
    %13 = arith.addf %10, %12 : vector<8x128xf32>
    %cst_15 = arith.constant dense<0.000000e+00> : vector<8xf32>
    %14 = vector.multi_reduction <add>, %13, %cst_15 [1] : vector<8x128xf32> to vector<8xf32>
    %15 = vector.shape_cast %14 : vector<8xf32> to vector<8x1xf32>
    %16 = arith.mulf %13, %13 : vector<8x128xf32>
    %cst_16 = arith.constant dense<0.000000e+00> : vector<8xf32>
    %17 = vector.multi_reduction <add>, %16, %cst_16 [1] : vector<8x128xf32> to vector<8xf32>
    %18 = vector.shape_cast %17 : vector<8xf32> to vector<8x1xf32>
    %cst_17 = arith.constant 1.250000e-01 : f32
    %19 = vector.broadcast %cst_17 : f32 to vector<8x1xf32>
    %20 = arith.mulf %15, %19 : vector<8x1xf32>
    %cst_18 = arith.constant 1.250000e-01 : f32
    %21 = vector.broadcast %cst_18 : f32 to vector<8x1xf32>
    %22 = arith.mulf %18, %21 : vector<8x1xf32>
    %23 = arith.mulf %20, %20 : vector<8x1xf32>
    %24 = arith.subf %22, %23 : vector<8x1xf32>
    %cst_19 = arith.constant 0.000000e+00 : f32
    %25 = vector.broadcast %cst_19 : f32 to vector<8x1xf32>
    %26 = arith.maximumf %24, %25 : vector<8x1xf32>
    %27 = vector.broadcast %20 : vector<8x1xf32> to vector<8x128xf32>
    %28 = arith.subf %13, %27 : vector<8x128xf32>
    %cst_20 = arith.constant 9.99999974E-6 : f32
    %29 = vector.broadcast %cst_20 : f32 to vector<8x1xf32>
    %30 = arith.addf %26, %29 : vector<8x1xf32>
    %31 = math.rsqrt %30 : vector<8x1xf32>
    %32 = vector.broadcast %31 : vector<8x1xf32> to vector<8x128xf32>
    %33 = arith.mulf %28, %32 : vector<8x128xf32>
    %c0_21 = arith.constant 0 : index
    %c0_22 = arith.constant 0 : index
    %34 = vector.load %arg5[%c0_21, %c0_22] : memref<1x128xf32, #tpu.memory_space<vmem>>, vector<1x128xf32>
    %35 = vector.broadcast %34 : vector<1x128xf32> to vector<8x128xf32>
    %36 = arith.mulf %33, %35 : vector<8x128xf32>
    %c0_23 = arith.constant 0 : index
    %c0_24 = arith.constant 0 : index
    %37 = vector.load %arg6[%c0_23, %c0_24] : memref<1x128xf32, #tpu.memory_space<vmem>>, vector<1x128xf32>
    %38 = vector.broadcast %37 : vector<1x128xf32> to vector<8x128xf32>
    %39 = arith.addf %36, %38 : vector<8x128xf32>
    %cst_25 = arith.constant 5.000000e-01 : f32
    %40 = vector.broadcast %cst_25 : f32 to vector<8x128xf32>
    %41 = arith.mulf %40, %39 : vector<8x128xf32>
    %cst_26 = arith.constant 4.471500e-02 : f32
    %42 = vector.broadcast %cst_26 : f32 to vector<8x128xf32>
    %43 = arith.mulf %42, %39 : vector<8x128xf32>
    %44 = arith.mulf %43, %39 : vector<8x128xf32>
    %45 = arith.mulf %44, %39 : vector<8x128xf32>
    %46 = arith.addf %39, %45 : vector<8x128xf32>
    %cst_27 = arith.constant 0.797884583 : f32
    %47 = vector.broadcast %cst_27 : f32 to vector<8x128xf32>
    %48 = arith.mulf %47, %46 : vector<8x128xf32>
    %49 = math.tanh %48 : vector<8x128xf32>
    %cst_28 = arith.constant 1.000000e+00 : f32
    %50 = vector.broadcast %cst_28 : f32 to vector<8x128xf32>
    %51 = arith.addf %50, %49 : vector<8x128xf32>
    %52 = arith.mulf %41, %51 : vector<8x128xf32>
    %c0_29 = arith.constant 0 : index
    %c0_30 = arith.constant 0 : index
    %c0_31 = arith.constant 0 : index
    %53 = vector.load %arg7[%c0_29, %c0_30, %c0_31] : memref<1x8x128xf32, #tpu.memory_space<vmem>>, vector<1x8x128xf32>
    %54 = vector.shape_cast %53 : vector<1x8x128xf32> to vector<8x128xf32>
    %55 = vector.shape_cast %52 : vector<8x128xf32> to vector<1x8x128xf32>
    tpu.vector_store %arg7[%c0_29, %c0_30, %c0_31], %55 {strides = array<i32>} : memref<1x8x128xf32, #tpu.memory_space<vmem>>, vector<1x8x128xf32>,
    return
  }
  func.func @transform_0(%arg0: i32, %arg1: i32) -> (i32, i32, i32, i32) {
    %c0_i32 = arith.constant 0 : i32
    %c0_i32_0 = arith.constant 0 : i32
    %c0_i32_1 = arith.constant 0 : i32
    return %arg0, %arg1, %c0_i32, %c0_i32_0 : i32, i32, i32, i32
  }
  func.func @transform_1(%arg0: i32, %arg1: i32) -> (i32, i32, i32) {
    %c0_i32 = arith.constant 0 : i32
    %c0_i32_0 = arith.constant 0 : i32
    %c0_i32_1 = arith.constant 0 : i32
    %c0_i32_2 = arith.constant 0 : i32
    return %c0_i32, %c0_i32_0, %c0_i32_1 : i32, i32, i32
  }
  func.func @transform_2(%arg0: i32, %arg1: i32) -> (i32, i32) {
    %c0_i32 = arith.constant 0 : i32
    %c0_i32_0 = arith.constant 0 : i32
    %c0_i32_1 = arith.constant 0 : i32
    return %c0_i32, %c0_i32_0 : i32, i32
  }
  func.func @transform_3(%arg0: i32, %arg1: i32) -> (i32, i32) {
    %c0_i32 = arith.constant 0 : i32
    %c0_i32_0 = arith.constant 0 : i32
    %c0_i32_1 = arith.constant 0 : i32
    return %c0_i32, %c0_i32_0 : i32, i32
  }
  func.func @transform_4(%arg0: i32, %arg1: i32) -> (i32, i32) {
    %c0_i32 = arith.constant 0 : i32
    %c0_i32_0 = arith.constant 0 : i32
    %c0_i32_1 = arith.constant 0 : i32
    return %c0_i32, %c0_i32_0 : i32, i32
  }
  func.func @transform_5(%arg0: i32, %arg1: i32) -> (i32, i32, i32) {
    %c0_i32 = arith.constant 0 : i32
    %c0_i32_0 = arith.constant 0 : i32
    return %arg0, %arg1, %c0_i32 : i32, i32, i32
  }
}

</mosaic_0001>

<llo_original>
// kernel: tpu_custom_call.1
$region0: #{tpu_custom_call.1}
  #allocation0 [shape = 'u32[]', space=smem, size = 0x4, offset = 0x4, fixed_abs, tag = 'smem constant byte address 0x4 - core index']
  #allocation1 [shape = 'u32[72,128]{1,0:T(1,128)}', space=vmem, size = 0x9000, scoped, tag = 'internal scratch']
  %s0 = inlined_call_operand.vmem [shape: f32[2,1,9,8], index: 0, kind: input, shape index: {}]
  %s1 = inlined_call_operand.vmem [shape: f32[2,8,128], index: 1, kind: input, shape index: {}]
  %s2 = inlined_call_operand.vmem [shape: f32[1,128], index: 2, kind: input, shape index: {}]
  %s3 = inlined_call_operand.vmem [shape: f32[1,128], index: 3, kind: input, shape index: {}]
  %s4 = inlined_call_operand.vmem [shape: f32[1,128], index: 4, kind: input, shape index: {}]
  %s5 = inlined_call_operand.hbm [shape: f32[2,8,128], index: 5, kind: output, shape index: {}]
  %s6 = sld [smem:[#allocation0]]
  $region53: #{tpu_custom_call.1} parent=0
    _
  %s8 = ssub.s32 1, %s6
  %s9 = scalar_select 0, %s8, %s6
  $region1: #{tpu_custom_call.1} parent=0
    #allocation2 [shape = 'u8[8192]{0}', space=vmem, size = 0x2000, scoped, tag = 'output window, operand 0']
    #allocation3 [shape = 's32[2]{0}', space=sflag, size = 0x8, scoped, tag = 'scoped memory for tpu_custom_call.1']
    %10 = vsyncpa [#allocation3], 0
    %s11 = scalar_lea.sflag [#allocation3], 1
    %12 = vsyncpa %s11, 0
    loop: start=0, step=1, limit=4
    $region2: #{tpu_custom_call.1} parent=1 // loop_pre_header
      _
    $region3: #{tpu_custom_call.1} parent=1 // loop_header
      %s14 = sphi 0, %s18
      %p15 = scmp.ge.s32.totalorder %s14, 4
      %s21 = sphi 0, %s33
      %s22 = sphi 0, %s29
      %s23 = sphi 0, %s21
      %s24 = sphi 0, %s22
      %s25 = sphi 0, %s23
      %s26 = sphi 0, %s24
      %s38 = sphi 0, %s40
      %s41 = sphi 0, %s38
      %s42 = sphi 0, %s41
      %s58 = sphi 0, %s42
      %s62 = sphi 0, %s62
      %s64 = sphi 0, %s62
      %s65 = sphi 0, %s64
      %s79 = sphi 0, %s65
      %s83 = sphi 0, %s83
      %s85 = sphi 0, %s83
      %s86 = sphi 0, %s85
      %s100 = sphi 0, %s86
      %s104 = sphi 0, %s104
      %s106 = sphi 0, %s104
      %s107 = sphi 0, %s106
      %s121 = sphi 0, %s107
      %s125 = sphi 0, %s125
      %s127 = sphi 0, %s125
      %s128 = sphi 0, %s127
      %s142 = sphi 0, %s128
      %s150 = sphi 0, %s152
      %s153 = sphi 0, %s150
      %s154 = sphi 0, %s153
      %s170 = sphi 0, %s154
    $region4: #{tpu_custom_call.1} parent=1 // loop_header_branch
      %17 = sbr.rel (%p15) target = $region8
    $region5: #{tpu_custom_call.1} parent=1 // loop_body
      %s19 = ssub.s32 %s14, 1
      %s20 = ssub.s32 %s14, 2
      %s27 = sadd.s32 1, %s22
      %p28 = scmp.ge.s32.totalorder %s27, 1
      %s29 = scalar_select %p28, 0, %s27
      %s30 = sadd.s32 1, %s21
      %s31 = scalar_select %p28, %s30, %s21
      %p32 = scmp.ge.s32.totalorder %s31, 2
      %s33 = scalar_select %p32, 0, %s31
      %s34 = ssub.s32 %s21, %s33
      %s35 = ssub.s32 %s22, %s29
      %s36 = sor.u32 %s34, %s35
      %p37 = scmp.eq.s32.totalorder %s36, 0
      %s39 = sadd.s32 %s38, 1
      %s40 = scalar_select %p37, %s38, %s39
      %p43 = pneg %p37
      %p44 = scmp.eq.s32.totalorder %s14, 1
      %p45 = por %p43, %p44
      %p46 = scmp.ne.s32.totalorder %s38, %s41
      %p47 = scmp.eq.s32.totalorder %s14, 0
      %p48 = por %p46, %p47
      %p49 = scmp.ne.s32.totalorder %s38, %s41
      %p50 = scmp.eq.s32.totalorder %s19, 1
      %p51 = por %p49, %p50
      %p52 = scmp.ne.s32.totalorder %s41, %s42
      %p53 = scmp.eq.s32.totalorder %s19, 0
      %p54 = por %p52, %p53
      %p55 = scmp.ne.s32.totalorder %s41, %s42
      %p56 = scmp.eq.s32.totalorder %s20, 1
      %p57 = por %p55, %p56
      %p59 = scmp.ne.s32.totalorder %s42, %s58
      %p60 = scmp.eq.s32.totalorder %s20, 0
      %p61 = por %p59, %p60
      %s63 = sadd.s32 %s62, 1
      %p66 = scmp.eq.s32.totalorder %s14, 1
      %p67 = scmp.ne.s32.totalorder %s62, %s64
      %p68 = scmp.eq.s32.totalorder %s14, 0
      %p69 = por %p67, %p68
      %p70 = scmp.ne.s32.totalorder %s62, %s64
      %p71 = scmp.eq.s32.totalorder %s19, 1
      %p72 = por %p70, %p71
      %p73 = scmp.ne.s32.totalorder %s64, %s65
      %p74 = scmp.eq.s32.totalorder %s19, 0
      %p75 = por %p73, %p74
      %p76 = scmp.ne.s32.totalorder %s64, %s65
      %p77 = scmp.eq.s32.totalorder %s20, 1
      %p78 = por %p76, %p77
      %p80 = scmp.ne.s32.totalorder %s65, %s79
      %p81 = scmp.eq.s32.totalorder %s20, 0
      %p82 = por %p80, %p81
      %s84 = sadd.s32 %s83, 1
      %p87 = scmp.eq.s32.totalorder %s14, 1
      %p88 = scmp.ne.s32.totalorder %s83, %s85
      %p89 = scmp.eq.s32.totalorder %s14, 0
      %p90 = por %p88, %p89
      %p91 = scmp.ne.s32.totalorder %s83, %s85
      %p92 = scmp.eq.s32.totalorder %s19, 1
      %p93 = por %p91, %p92
      %p94 = scmp.ne.s32.totalorder %s85, %s86
      %p95 = scmp.eq.s32.totalorder %s19, 0
      %p96 = por %p94, %p95
      %p97 = scmp.ne.s32.totalorder %s85, %s86
      %p98 = scmp.eq.s32.totalorder %s20, 1
      %p99 = por %p97, %p98
      %p101 = scmp.ne.s32.totalorder %s86, %s100
      %p102 = scmp.eq.s32.totalorder %s20, 0
      %p103 = por %p101, %p102
      %s105 = sadd.s32 %s104, 1
      %p108 = scmp.eq.s32.totalorder %s14, 1
      %p109 = scmp.ne.s32.totalorder %s104, %s106
      %p110 = scmp.eq.s32.totalorder %s14, 0
      %p111 = por %p109, %p110
      %p112 = scmp.ne.s32.totalorder %s104, %s106
      %p113 = scmp.eq.s32.totalorder %s19, 1
      %p114 = por %p112, %p113
      %p115 = scmp.ne.s32.totalorder %s106, %s107
      %p116 = scmp.eq.s32.totalorder %s19, 0
      %p117 = por %p115, %p116
      %p118 = scmp.ne.s32.totalorder %s106, %s107
      %p119 = scmp.eq.s32.totalorder %s20, 1
      %p120 = por %p118, %p119
      %p122 = scmp.ne.s32.totalorder %s107, %s121
      %p123 = scmp.eq.s32.totalorder %s20, 0
      %p124 = por %p122, %p123
      %s126 = sadd.s32 %s125, 1
      %p129 = scmp.eq.s32.totalorder %s14, 1
      %p130 = scmp.ne.s32.totalorder %s125, %s127
      %p131 = scmp.eq.s32.totalorder %s14, 0
      %p132 = por %p130, %p131
      %p133 = scmp.ne.s32.totalorder %s125, %s127
      %p134 = scmp.eq.s32.totalorder %s19, 1
      %p135 = por %p133, %p134
      %p136 = scmp.ne.s32.totalorder %s127, %s128
      %p137 = scmp.eq.s32.totalorder %s19, 0
      %p138 = por %p136, %p137
      %p139 = scmp.ne.s32.totalorder %s127, %s128
      %p140 = scmp.eq.s32.totalorder %s20, 1
      %p141 = por %p139, %p140
      %p143 = scmp.ne.s32.totalorder %s128, %s142
      %p144 = scmp.eq.s32.totalorder %s20, 0
      %p145 = por %p143, %p144
      %s146 = ssub.s32 %s21, %s33
      %s147 = ssub.s32 %s22, %s29
      %s148 = sor.u32 %s146, %s147
      %p149 = scmp.eq.s32.totalorder %s148, 0
      %s151 = sadd.s32 %s150, 1
      %s152 = scalar_select %p149, %s150, %s151
      %p155 = pneg %p149
      %p156 = scmp.eq.s32.totalorder %s14, 1
      %p157 = por %p155, %p156
      %p158 = scmp.ne.s32.totalorder %s150, %s153
      %p159 = scmp.eq.s32.totalorder %s14, 0
      %p160 = por %p158, %p159
      %p161 = scmp.ne.s32.totalorder %s150, %s153
      %p162 = scmp.eq.s32.totalorder %s19, 1
      %p163 = por %p161, %p162
      %p164 = scmp.ne.s32.totalorder %s153, %s154
      %p165 = scmp.eq.s32.totalorder %s19, 0
      %p166 = por %p164, %p165
      %p167 = scmp.ne.s32.totalorder %s153, %s154
      %p168 = scmp.eq.s32.totalorder %s20, 1
      %p169 = por %p167, %p168
      %p171 = scmp.ne.s32.totalorder %s154, %s170
      %p172 = scmp.eq.s32.totalorder %s20, 0
      %p173 = por %p171, %p172
      %p174 = scmp.le.s32.totalorder 1, %s14
      %p175 = scmp.lt.s32.totalorder %s14, 3
      %p176 = pnand %p174, %p175
      %p177 = pneg %p176
      // Predicated region
      $region9: #{tpu_custom_call.1} parent=5 // pred_check
        _
      $region10: #{tpu_custom_call.1} parent=5 // pred_check_branch
        %179 = sbr.rel (%p176) target = $region12
      $region11: #{tpu_custom_call.1} parent=5 // pred_region
        %s180 = ssub.s32 %s14, 1
        // Predicated region
        $region13: #{tpu_custom_call.1} parent=11 // pred_check
          %p181 = pneg %p75
        $region14: #{tpu_custom_call.1} parent=11 // pred_check_branch
          %183 = sbr.rel (%p181) target = $region16
        $region15: #{tpu_custom_call.1} parent=11 // pred_region
          _
        $region16: #{tpu_custom_call.1} parent=11 // pred_fallthru
          _
        // Predicated region
        $region17: #{tpu_custom_call.1} parent=11 // pred_check
          %p184 = pneg %p96
        $region18: #{tpu_custom_call.1} parent=11 // pred_check_branch
          %186 = sbr.rel (%p184) target = $region20
        $region19: #{tpu_custom_call.1} parent=11 // pred_region
          _
        $region20: #{tpu_custom_call.1} parent=11 // pred_fallthru
          _
        // Predicated region
        $region21: #{tpu_custom_call.1} parent=11 // pred_check
          %p187 = pneg %p117
        $region22: #{tpu_custom_call.1} parent=11 // pred_check_branch
          %189 = sbr.rel (%p187) target = $region24
        $region23: #{tpu_custom_call.1} parent=11 // pred_region
          _
        $region24: #{tpu_custom_call.1} parent=11 // pred_fallthru
          _
        // Predicated region
        $region25: #{tpu_custom_call.1} parent=11 // pred_check
          %p190 = pneg %p138
        $region26: #{tpu_custom_call.1} parent=11 // pred_check_branch
          %192 = sbr.rel (%p190) target = $region28
        $region27: #{tpu_custom_call.1} parent=11 // pred_region
          _
        $region28: #{tpu_custom_call.1} parent=11 // pred_fallthru
          _
      $region12: #{tpu_custom_call.1} parent=5 // pred_fallthru
        _
      %p193 = scmp.lt.s32.totalorder %s14, 2
      // Predicated region
      $region29: #{tpu_custom_call.1} parent=5 // pred_check
        %p194 = pneg %p193
      $region30: #{tpu_custom_call.1} parent=5 // pred_check_branch
        %196 = sbr.rel (%p194) target = $region32
      $region31: #{tpu_custom_call.1} parent=5 // pred_region
        // Predicated region
        $region33: #{tpu_custom_call.1} parent=31 // pred_check
          %p197 = pneg %p48
        $region34: #{tpu_custom_call.1} parent=31 // pred_check_branch
          %199 = sbr.rel (%p197) target = $region36
        $region35: #{tpu_custom_call.1} parent=31 // pred_region
          %p200 = scmp.lt.s32.totalorder %s21, 1
          %s201 = scalar_select %p200, %s21, 1
          %p202 = scmp.lt.s32.totalorder %s22, 0
          %s203 = scalar_select %p202, %s22, 0
          %s204 = smul.addr %s203, 2
          %s205 = smul.addr %s201, 2
          %s206 = sadd.s32 %s204, %s205
          %s207 = smul.addr %s206, 8
          %s208 = scalar_lea.vmem %s0, %s207
        $region36: #{tpu_custom_call.1} parent=31 // pred_fallthru
          _
      $region32: #{tpu_custom_call.1} parent=5 // pred_fallthru
        _
      %p209 = scmp.le.s32.totalorder 1, %s14
      %p210 = scmp.lt.s32.totalorder %s14, 3
      %p211 = pnand %p209, %p210
      %p212 = pneg %p211
      // Predicated region
      $region37: #{tpu_custom_call.1} parent=5 // pred_check
        _
      $region38: #{tpu_custom_call.1} parent=5 // pred_check_branch
        %214 = sbr.rel (%p211) target = $region40
      $region39: #{tpu_custom_call.1} parent=5 // pred_region
        %s215 = ssub.s32 %s14, 1
        %p216 = scmp.lt.s32.totalorder %s23, 1
        %s217 = scalar_select %p216, %s23, 1
        %p218 = scmp.lt.s32.totalorder %s24, 0
        %s219 = scalar_select %p218, %s24, 0
        %s220 = smul.addr %s219, 2
        %s221 = smul.addr %s217, 2
        %s222 = sadd.s32 %s220, %s221
        %s223 = smul.addr %s222, 8
        %s224 = scalar_lea.vmem %s0, %s223
        %p225 = pneg %p54
        %p226 = pneg %p51
        %p227 = pneg %p75
        %p228 = pneg %p72
        %p229 = pneg %p96
        %p230 = pneg %p93
        %p231 = pneg %p117
        %p232 = pneg %p114
        %p233 = pneg %p138
        %p234 = pneg %p135
        %p235 = pneg %p166
        %p236 = pneg %p163
        %s237 = sand.u32 %s153, 1
        %s238 = scalar_lea.sflag [#allocation3], %s237
        %s239 = sand.u32 %s153, 1
        %s240 = smul.addr %s239, 8
        %s241 = scalar_lea.vmem [#allocation2], %s240
        %p242 = scmp.lt.s32.totalorder %s23, 1
        %s243 = scalar_select %p242, %s23, 1
        %p244 = scmp.lt.s32.totalorder %s24, 0
        %s245 = scalar_select %p244, %s24, 0
        %s246 = smul.addr %s245, 2
        %s247 = smul.addr %s243, 2
        %s248 = sadd.s32 %s246, %s247
        %s249 = smul.addr %s248, 8
        %s250 = scalar_lea.vmem %s0, %s249
        %v251 = vld [vmem:[%s250] sm:$0xff]
        %v252 = vld [vmem:[%s1] sm:$0xff]
        %v253 = vld [vmem:[%s250 + $0x1] sm:$0xff]
        %s254 = scalar_lea.vmem %s1, 8
        %v255 = vld [vmem:[%s254] sm:$0xff]
        %vm256 = vcmask 64512
        %v258 = vsel %vm256, %v253, 0
        %260 = vmatpush.msra.mxu0 0.0
        %261 = vmatpush.msra.mxu0 0.0
        %262 = vmatpush.msra.mxu0 0.0
        %263 = vmatpush.msra.mxu0 0.0
        %264 = vmatpush.msra.mxu0 0.0
        %265 = vmatpush.msra.mxu0 0.0
        %266 = vmatpush.msra.mxu0 0.0
        %267 = vmatpush.msra.mxu0 0.0
        %268 = vmatpush.msra.mxu0 0.0
        %269 = vmatpush.msra.mxu0 0.0
        %270 = vmatpush.msra.mxu0 0.0
        %271 = vmatpush.msra.mxu0 0.0
        %272 = vmatpush.msra.mxu0 0.0
        %273 = vmatpush.msra.mxu0 0.0
        %274 = vmatpush.msra.mxu0 0.0
        %275 = vmatpush.msra.mxu0 %v255
        %276 = vmatmul.f32.gmra.mxu0 %v258
        %v277 = vpop.f32.mrf.mxu0
        %v278 = vadd.f32 0.0, %v277
        %279 = vdwg.mxu0
        %v281 = vsel %vm256, %v251, 0
        %283 = vmatpush.msra.mxu0 0.0
        %284 = vmatpush.msra.mxu0 0.0
        %285 = vmatpush.msra.mxu0 0.0
        %286 = vmatpush.msra.mxu0 0.0
        %287 = vmatpush.msra.mxu0 0.0
        %288 = vmatpush.msra.mxu0 0.0
        %289 = vmatpush.msra.mxu0 0.0
        %290 = vmatpush.msra.mxu0 0.0
        %291 = vmatpush.msra.mxu0 0.0
        %292 = vmatpush.msra.mxu0 0.0
        %293 = vmatpush.msra.mxu0 0.0
        %294 = vmatpush.msra.mxu0 0.0
        %295 = vmatpush.msra.mxu0 0.0
        %296 = vmatpush.msra.mxu0 0.0
        %297 = vmatpush.msra.mxu0 0.0
        %298 = vmatpush.msra.mxu0 %v252
        %299 = vmatmul.f32.gmra.mxu0 %v281
        %v300 = vpop.f32.mrf.mxu0
        %v301 = vadd.f32 %v278, %v300
        %302 = vdwg.mxu0
        %v303 = vld [vmem:[%s2] sm:$0x1]
        %v305 = vperm.slane %v303, 0
        %v307 = vadd.f32 %v301, %v305
        %308 = vadd.xlane.f32.xlu0 %v307
        %v309 = vpop.xlane.xlu0 %308
        %v310 = vmul.f32 %v307, %v307
        %311 = vadd.xlane.f32.xlu0 %v310
        %v312 = vpop.xlane.xlu0 %311
        %v313 = vmul.f32 %v309, 0.125
        %v314 = vmul.f32 %v312, 0.125
        %v315 = vmul.f32 %v313, %v313
        %v316 = vsub.f32 %v314, %v315
        %v317 = vmax.f32 %v316, 0.0
        %v318 = vsub.f32 %v307, %v313
        %v319 = vadd.f32 %v317, 1e-05
        %v320 = vrsqrt.pop %v319
        %v321 = vmul.f32 %v320, %v319
        %v322 = vmul.f32 %v321, %v320
        %v323 = vmul.f32 0.5, %v322
        %v324 = vsub.f32 1.5, %v323
        %v325 = vmul.f32 %v320, %v324
        %vm326 = vweird.f32 %v319
        %vm327 = vweird.f32 %v320
        %vm328 = vmor %vm326, %vm327
        %v329 = vsel %vm328, %v320, %v325
        %v330 = vmul.f32 %v318, %v329
        %v331 = vld [vmem:[%s3] sm:$0x1]
        %v333 = vperm.slane %v331, 0
        %v335 = vmul.f32 %v330, %v333
        %v336 = vld [vmem:[%s4] sm:$0x1]
        %v338 = vperm.slane %v336, 0
        %v340 = vadd.f32 %v335, %v338
        %v341 = vmul.f32 %v340, 0.5
        %v342 = vmul.f32 %v340, 0.044715
        %v343 = vmul.f32 %v342, %v340
        %v344 = vmul.f32 %v343, %v340
        %v345 = vadd.f32 %v340, %v344
        %v346 = vmul.f32 %v345, 0.7978846
        %v347 = vtanh.pop %v346
        %v348 = vadd.f32 %v347, 1.0
        %v349 = vmul.f32 %v341, %v348
        %350 = vst [vmem:[%s241] sm:$0xff] %v349
        %s351 = sand.u32 %s153, 1
        %s352 = scalar_lea.sflag [#allocation3], %s351
        %s353 = sand.u32 %s153, 1
        %s354 = smul.addr %s353, 8
        %s355 = scalar_lea.vmem [#allocation2], %s354
        // Predicated region
        $region41: #{tpu_custom_call.1} parent=39 // pred_check
          %p356 = pneg %p163
        $region42: #{tpu_custom_call.1} parent=39 // pred_check_branch
          %358 = sbr.rel (%p356) target = $region44
        $region43: #{tpu_custom_call.1} parent=39 // pred_region
          %360 = vsyncadd %s352, 0
          %s361 = sadd.s32 %s24, %s23
          %s362 = smul.addr %s361, 8
          %s363 = scalar_lea.hbm %s5, %s362
          %s365 = sshll.u32 %s355, 4
          %s366 = int_to_ptr.vmem [resolvable:$true] %s365
          %s367 = sshll.u32 %s363, 4
          %s368 = int_to_ptr.hbm [resolvable:$true] %s367
          %370 = dma.vmem_to_hbm [thread:$0]  %s366, 128, %s368, %s352
        $region44: #{tpu_custom_call.1} parent=39 // pred_fallthru
          _
      $region40: #{tpu_custom_call.1} parent=5 // pred_fallthru
        _
      %p371 = scmp.le.s32.totalorder 2, %s14
      // Predicated region
      $region45: #{tpu_custom_call.1} parent=5 // pred_check
        %p372 = pneg %p371
      $region46: #{tpu_custom_call.1} parent=5 // pred_check_branch
        %374 = sbr.rel (%p372) target = $region48
      $region47: #{tpu_custom_call.1} parent=5 // pred_region
        %s375 = ssub.s32 %s14, 2
        // Predicated region
        $region49: #{tpu_custom_call.1} parent=47 // pred_check
          %p376 = pneg %p169
        $region50: #{tpu_custom_call.1} parent=47 // pred_check_branch
          %378 = sbr.rel (%p376) target = $region52
        $region51: #{tpu_custom_call.1} parent=47 // pred_region
          %s379 = sand.u32 %s154, 1
          %s380 = scalar_lea.sflag [#allocation3], %s379
          %s381 = sand.u32 %s154, 1
          %s382 = smul.addr %s381, 8
          %s383 = scalar_lea.vmem [#allocation2], %s382
          %385 = dma.done %s380, 128
        $region52: #{tpu_custom_call.1} parent=47 // pred_fallthru
          _
      $region48: #{tpu_custom_call.1} parent=5 // pred_fallthru
        _
    $region6: #{tpu_custom_call.1} parent=1 // loop_footer
      %s18 = sadd.s32 1, %s14
    $region7: #{tpu_custom_call.1} parent=1 // loop_footer_branch
      %13 = sbr.rel target = $region3
    $region8: #{tpu_custom_call.1} parent=1 // loop_exit
      _
    %386 = vsyncpa [#allocation3], 1
    %s387 = scalar_lea.sflag [#allocation3], 1
    %388 = vsyncpa %s387, 1

</llo_original>
